<compile_context>
chip_gen: v7x
topology: tpu7x:2x2x1
jax: 0.10.0
libtpu: 0.0.40
codegen_flags: <defaults>
</compile_context>

<pallas_src>
import functools

import jax
import jax.numpy as jnp
from jax.experimental import pallas as pl
from jax.experimental.pallas import tpu as pltpu


def _round_up(x, m):
    return ((x + m - 1) // m) * m


def _gcn_fused_kernel(*refs, num_layers):
    """refs = (a_ref, h_ref, w0, b0, w1, b1, ..., w_{L-1}, b_{L-1}, o_ref).

    Everything lives in VMEM as single full blocks.  The static Python loop over
    layers is unrolled at trace time; A is loaded once and reused for all layers.
    """
    a_ref, h_ref = refs[0], refs[1]
    o_ref = refs[-1]
    wb = refs[2:-1]

    a = a_ref[...]                            # bf16 [Np, Np], single HBM read
    h = h_ref[...].astype(jnp.float32)        # f32 working features, VMEM-resident

    for i in range(num_layers):
        w = wb[2 * i][...]                    # bf16 [Fin_p, Fout_p]
        b = wb[2 * i + 1][...]                # f32  [1, Fout_p]
        # Feature transform on the MXU (bf16 inputs, f32 accumulate).
        hw = jnp.dot(h.astype(jnp.bfloat16), w,
                     preferred_element_type=jnp.float32)
        # Neighborhood aggregation on the MXU.
        agg = jnp.dot(a, hw.astype(jnp.bfloat16),
                      preferred_element_type=jnp.float32)
        h = agg + b
        if i != num_layers - 1:
            h = jnp.maximum(h, 0.0)

    o_ref[...] = h.astype(o_ref.dtype)


def gcn_forward(a_norm, features, params):
    """Fused L-layer GCN forward.

    a_norm:   [N, N] float32 normalized adjacency
    features: [N, Fin] float32 node features
    params:   list of (W [Fin_i, Fout_i] float32, b [1, Fout_i] float32)
    returns   [N, n_classes] float32
    """
    n = features.shape[0]
    n_classes = params[-1][0].shape[1]
    num_layers = len(params)

    # Pad node count to the sublane quantum and feature widths to the 128-lane
    # vreg width so all matmul columns and the output store are lane-dense.
    np_ = _round_up(n, 8)
    dims = [features.shape[1]] + [w.shape[1] for w, _ in params]
    dims_p = [_round_up(d, 128) for d in dims]

    a_p = jnp.zeros((np_, np_), jnp.bfloat16).at[:n, :n].set(
        a_norm.astype(jnp.bfloat16))
    h_p = jnp.zeros((np_, dims_p[0]), jnp.bfloat16).at[:n, :dims[0]].set(
        features.astype(jnp.bfloat16))

    flat_inputs = [a_p, h_p]
    flops = 0
    bytes_accessed = a_p.size * 2 + h_p.size * 2
    for i, (w, b) in enumerate(params):
        fi, fo = w.shape
        fip, fop = dims_p[i], dims_p[i + 1]
        w_p = jnp.zeros((fip, fop), jnp.bfloat16).at[:fi, :fo].set(
            w.astype(jnp.bfloat16))
        b_p = jnp.zeros((1, fop), jnp.float32).at[:, :fo].set(
            b.reshape(1, fo).astype(jnp.float32))
        flat_inputs += [w_p, b_p]
        flops += 2 * np_ * fip * fop + 2 * np_ * np_ * fop
        bytes_accessed += w_p.size * 2 + b_p.size * 4

    out_shape = (np_, dims_p[-1])
    bytes_accessed += out_shape[0] * out_shape[1] * 4

    # VMEM budget: all inputs + output + a couple of f32 intermediates, with
    # headroom; clamp to the v7x physical VMEM (64 MiB).
    scratch_guess = 3 * np_ * max(dims_p) * 4
    vmem_bytes = int(min(64 * 1024 * 1024,
                         max(16 * 1024 * 1024,
                             2 * (bytes_accessed + scratch_guess))))

    kernel = functools.partial(_gcn_fused_kernel, num_layers=num_layers)
    out_p = pl.pallas_call(
        kernel,
        out_shape=jax.ShapeDtypeStruct(out_shape, jnp.float32),
        in_specs=[pl.BlockSpec(memory_space=pltpu.VMEM)] * len(flat_inputs),
        out_specs=pl.BlockSpec(memory_space=pltpu.VMEM),
        compiler_params=pltpu.CompilerParams(vmem_limit_bytes=vmem_bytes),
        cost_estimate=pl.CostEstimate(
            flops=flops, transcendentals=0, bytes_accessed=bytes_accessed),
    )(*flat_inputs)

    return out_p[:n, :n_classes]


def gcn_reference(a_norm, features, params):
    """Pure-JAX reference with the same bf16-in / f32-accumulate numerics."""
    a = a_norm.astype(jnp.bfloat16)
    h = features.astype(jnp.bfloat16).astype(jnp.float32)
    num_layers = len(params)
    for i, (w, b) in enumerate(params):
        hw = jnp.dot(h.astype(jnp.bfloat16), w.astype(jnp.bfloat16),
                     preferred_element_type=jnp.float32)
        h = jnp.dot(a, hw.astype(jnp.bfloat16),
                    preferred_element_type=jnp.float32) + b
        if i != num_layers - 1:
            h = jnp.maximum(h, 0.0)
    return h


def make_params(key, in_feats, n_hidden, n_classes, n_layers):
    """Glorot-uniform weights + zero bias, matching the module's layer shapes."""
    dims = [in_feats] + [n_hidden] * n_layers + [n_classes]
    params = []
    for i in range(len(dims) - 1):
        key, sub = jax.random.split(key)
        fan_in, fan_out = dims[i], dims[i + 1]
        limit = (6.0 / (fan_in + fan_out)) ** 0.5
        w = jax.random.uniform(sub, (fan_in, fan_out), jnp.float32, -limit, limit)
        b = jnp.zeros((1, fan_out), jnp.float32)
        params.append((w, b))
    return params


def make_norm_adj(key, n_nodes):
    """Random symmetric graph with self-loops, D^{-1/2} A D^{-1/2} normalization."""
    a = (jax.random.uniform(key, (n_nodes, n_nodes)) > 0.7).astype(jnp.float32)
    a = jnp.maximum(a, a.T)                                   # symmetric
    a = jnp.maximum(a, jnp.eye(n_nodes, dtype=jnp.float32))   # self-loops
    deg = jnp.sum(a, axis=1)
    d_inv_sqrt = 1.0 / jnp.sqrt(deg)
    return a * d_inv_sqrt[:, None] * d_inv_sqrt[None, :]


if __name__ == "__main__":
    key = jax.random.PRNGKey(0)
    k_adj, k_feat, k_param = jax.random.split(key, 3)

    # Small shapes consistent with the module.
    n_nodes, in_feats, n_hidden, n_classes, n_layers = 16, 8, 32, 4, 2

    a_norm = make_norm_adj(k_adj, n_nodes)
    features = jax.random.normal(k_feat, (n_nodes, in_feats), jnp.float32)
    params = make_params(k_param, in_feats, n_hidden, n_classes, n_layers)

    out = gcn_forward(a_norm, features, params)
    out = jax.block_until_ready(out)

    assert out.shape == (n_nodes, n_classes), out.shape
    assert out.dtype == jnp.float32

    ref = gcn_reference(a_norm, features, params)
    assert jnp.allclose(out, ref, atol=2e-2, rtol=2e-2), (
        float(jnp.max(jnp.abs(out - ref))))

    print("KERNEL_OK")
</pallas_src>

<mosaic_0001>
module attributes {stable_mosaic.version = 11 : i64} {
  func.func @_gcn_fused_kernel(%arg0: memref<16x16xbf16, #tpu.memory_space<vmem>>, %arg1: memref<16x128xbf16, #tpu.memory_space<vmem>>, %arg2: memref<128x128xbf16, #tpu.memory_space<vmem>>, %arg3: memref<1x128xf32, #tpu.memory_space<vmem>>, %arg4: memref<128x128xbf16, #tpu.memory_space<vmem>>, %arg5: memref<1x128xf32, #tpu.memory_space<vmem>>, %arg6: memref<128x128xbf16, #tpu.memory_space<vmem>>, %arg7: memref<1x128xf32, #tpu.memory_space<vmem>>, %arg8: memref<16x128xf32, #tpu.memory_space<vmem>>) attributes {dimension_semantics = [], scalar_prefetch = 0 : i64, scratch_operands = 0 : i64, tpu.core_type = #tpu.core_type<tc>} {
    %c0 = arith.constant 0 : index
    %c0_0 = arith.constant 0 : index
    %0 = vector.load %arg0[%c0, %c0_0] : memref<16x16xbf16, #tpu.memory_space<vmem>>, vector<16x16xbf16>
    %c0_1 = arith.constant 0 : index
    %c0_2 = arith.constant 0 : index
    %1 = vector.load %arg1[%c0_1, %c0_2] : memref<16x128xbf16, #tpu.memory_space<vmem>>, vector<16x128xbf16>
    %2 = arith.extf %1 : vector<16x128xbf16> to vector<16x128xf32>
    %c0_3 = arith.constant 0 : index
    %c0_4 = arith.constant 0 : index
    %3 = vector.load %arg2[%c0_3, %c0_4] : memref<128x128xbf16, #tpu.memory_space<vmem>>, vector<128x128xbf16>
    %c0_5 = arith.constant 0 : index
    %c0_6 = arith.constant 0 : index
    %4 = vector.load %arg3[%c0_5, %c0_6] : memref<1x128xf32, #tpu.memory_space<vmem>>, vector<1x128xf32>
    %5 = arith.truncf %2 : vector<16x128xf32> to vector<16x128xbf16>
    %cst = arith.constant dense<0.000000e+00> : vector<16x128xf32>
    %6 = tpu.matmul %5, %3, %cst {dimension_numbers = #tpu.dot_dimension_numbers<[1], [0], [0], [1], [0, 0, 1, 1], [], []>} : vector<16x128xbf16>, vector<128x128xbf16>, vector<16x128xf32> -> vector<16x128xf32>
    %7 = arith.truncf %6 : vector<16x128xf32> to vector<16x128xbf16>
    %cst_7 = arith.constant dense<0.000000e+00> : vector<16x128xf32>
    %8 = tpu.matmul %0, %7, %cst_7 {dimension_numbers = #tpu.dot_dimension_numbers<[1], [0], [0], [1], [0, 0, 1, 1], [], []>} : vector<16x16xbf16>, vector<16x128xbf16>, vector<16x128xf32> -> vector<16x128xf32>
    %9 = vector.broadcast %4 : vector<1x128xf32> to vector<16x128xf32>
    %10 = arith.addf %8, %9 : vector<16x128xf32>
    %cst_8 = arith.constant 0.000000e+00 : f32
    %11 = vector.broadcast %cst_8 : f32 to vector<16x128xf32>
    %12 = arith.maximumf %10, %11 : vector<16x128xf32>
    %c0_9 = arith.constant 0 : index
    %c0_10 = arith.constant 0 : index
    %13 = vector.load %arg4[%c0_9, %c0_10] : memref<128x128xbf16, #tpu.memory_space<vmem>>, vector<128x128xbf16>
    %c0_11 = arith.constant 0 : index
    %c0_12 = arith.constant 0 : index
    %14 = vector.load %arg5[%c0_11, %c0_12] : memref<1x128xf32, #tpu.memory_space<vmem>>, vector<1x128xf32>
    %15 = arith.truncf %12 : vector<16x128xf32> to vector<16x128xbf16>
    %cst_13 = arith.constant dense<0.000000e+00> : vector<16x128xf32>
    %16 = tpu.matmul %15, %13, %cst_13 {dimension_numbers = #tpu.dot_dimension_numbers<[1], [0], [0], [1], [0, 0, 1, 1], [], []>} : vector<16x128xbf16>, vector<128x128xbf16>, vector<16x128xf32> -> vector<16x128xf32>
    %17 = arith.truncf %16 : vector<16x128xf32> to vector<16x128xbf16>
    %cst_14 = arith.constant dense<0.000000e+00> : vector<16x128xf32>
    %18 = tpu.matmul %0, %17, %cst_14 {dimension_numbers = #tpu.dot_dimension_numbers<[1], [0], [0], [1], [0, 0, 1, 1], [], []>} : vector<16x16xbf16>, vector<16x128xbf16>, vector<16x128xf32> -> vector<16x128xf32>
    %19 = vector.broadcast %14 : vector<1x128xf32> to vector<16x128xf32>
    %20 = arith.addf %18, %19 : vector<16x128xf32>
    %cst_15 = arith.constant 0.000000e+00 : f32
    %21 = vector.broadcast %cst_15 : f32 to vector<16x128xf32>
    %22 = arith.maximumf %20, %21 : vector<16x128xf32>
    %c0_16 = arith.constant 0 : index
    %c0_17 = arith.constant 0 : index
    %23 = vector.load %arg6[%c0_16, %c0_17] : memref<128x128xbf16, #tpu.memory_space<vmem>>, vector<128x128xbf16>
    %c0_18 = arith.constant 0 : index
    %c0_19 = arith.constant 0 : index
    %24 = vector.load %arg7[%c0_18, %c0_19] : memref<1x128xf32, #tpu.memory_space<vmem>>, vector<1x128xf32>
    %25 = arith.truncf %22 : vector<16x128xf32> to vector<16x128xbf16>
    %cst_20 = arith.constant dense<0.000000e+00> : vector<16x128xf32>
    %26 = tpu.matmul %25, %23, %cst_20 {dimension_numbers = #tpu.dot_dimension_numbers<[1], [0], [0], [1], [0, 0, 1, 1], [], []>} : vector<16x128xbf16>, vector<128x128xbf16>, vector<16x128xf32> -> vector<16x128xf32>
    %27 = arith.truncf %26 : vector<16x128xf32> to vector<16x128xbf16>
    %cst_21 = arith.constant dense<0.000000e+00> : vector<16x128xf32>
    %28 = tpu.matmul %0, %27, %cst_21 {dimension_numbers = #tpu.dot_dimension_numbers<[1], [0], [0], [1], [0, 0, 1, 1], [], []>} : vector<16x16xbf16>, vector<16x128xbf16>, vector<16x128xf32> -> vector<16x128xf32>
    %29 = vector.broadcast %24 : vector<1x128xf32> to vector<16x128xf32>
    %30 = arith.addf %28, %29 : vector<16x128xf32>
    %c0_22 = arith.constant 0 : index
    %c0_23 = arith.constant 0 : index
    %31 = vector.load %arg8[%c0_22, %c0_23] : memref<16x128xf32, #tpu.memory_space<vmem>>, vector<16x128xf32>
    tpu.vector_store %arg8[%c0_22, %c0_23], %30 {strides = array<i32>} : memref<16x128xf32, #tpu.memory_space<vmem>>, vector<16x128xf32>,
    return
  }
}

</mosaic_0001>

<llo_original>
// kernel: tpu_custom_call.1
$region0: #{tpu_custom_call.1}
  #allocation0 [shape = 'u32[]', space=smem, size = 0x4, offset = 0x4, fixed_abs, tag = 'smem constant byte address 0x4 - core index']
  #allocation1 [shape = 'u32[144,128]{1,0:T(1,128)}', space=vmem, size = 0x12000, scoped, tag = 'internal scratch']
  %s0 = inlined_call_operand.hbm [shape: bf16[16,16], index: 0, kind: input, shape index: {}]
  %s1 = inlined_call_operand.hbm [shape: bf16[16,128], index: 1, kind: input, shape index: {}]
  %s2 = inlined_call_operand.hbm [shape: bf16[128,128], index: 2, kind: input, shape index: {}]
  %s3 = inlined_call_operand.vmem [shape: f32[1,128], index: 3, kind: input, shape index: {}]
  %s4 = inlined_call_operand.hbm [shape: bf16[128,128], index: 4, kind: input, shape index: {}]
  %s5 = inlined_call_operand.vmem [shape: f32[1,128], index: 5, kind: input, shape index: {}]
  %s6 = inlined_call_operand.hbm [shape: bf16[128,128], index: 6, kind: input, shape index: {}]
  %s7 = inlined_call_operand.vmem [shape: f32[1,128], index: 7, kind: input, shape index: {}]
  %s8 = inlined_call_operand.hbm [shape: f32[16,128], index: 8, kind: output, shape index: {}]
  %s9 = sld [smem:[#allocation0]]
  $region62: #{tpu_custom_call.1} parent=0
    _
  %s11 = ssub.s32 1, %s9
  %s12 = scalar_select 0, %s11, %s9
  $region1: #{tpu_custom_call.1} parent=0
    #allocation2 [shape = 'u8[4096]{0}', space=vmem, size = 0x1000, scoped, tag = 'input window, operand 0, single buffered']
    #allocation3 [shape = 's32[1]{0}', space=sflag, size = 0x4, scoped, tag = 'scoped memory for tpu_custom_call.1']
    #allocation4 [shape = 's32[1]{0}', space=sflag, size = 0x4, scoped, tag = 'scoped memory for tpu_custom_call.1']
    #allocation5 [shape = 'u8[4096]{0}', space=vmem, size = 0x1000, scoped, tag = 'input window, operand 1, single buffered']
    #allocation6 [shape = 's32[1]{0}', space=sflag, size = 0x4, scoped, tag = 'scoped memory for tpu_custom_call.1']
    #allocation7 [shape = 'u8[32768]{0}', space=vmem, size = 0x8000, scoped, tag = 'input window, operand 2, single buffered']
    #allocation8 [shape = 'u8[32768]{0}', space=vmem, size = 0x8000, scoped, tag = 'input window, operand 4, single buffered']
    #allocation9 [shape = 's32[1]{0}', space=sflag, size = 0x4, scoped, tag = 'scoped memory for tpu_custom_call.1']
    #allocation10 [shape = 'u8[32768]{0}', space=vmem, size = 0x8000, scoped, tag = 'input window, operand 6, single buffered']
    #allocation11 [shape = 'u8[8192]{0}', space=vmem, size = 0x2000, scoped, tag = 'output window, operand 0, single buffered']
    %13 = vsyncpa [#allocation3], 0
    %14 = vsyncpa [#allocation6], 0
    %15 = vsyncpa [#allocation9], 0
    %16 = vsyncpa [#allocation4], 0
    // Predicated region
    $region2: #{tpu_custom_call.1} parent=1 // pred_check
      _
    $region3: #{tpu_custom_call.1} parent=1 // pred_check_branch
      %18 = sbr.rel (0) target = $region5
    $region4: #{tpu_custom_call.1} parent=1 // pred_region
      %s20 = ssub.s32 128, 128
      %21 = vsyncadd [#allocation3], %s20
      %s22 = sshll.u32 [#allocation2], 4
      %s23 = int_to_ptr.vmem [resolvable:$true] %s22
      %28 = dma.hbm_to_vmem [thread:$0]  %s0, 128, %s23, [#allocation3], 64, 64, 4
    $region5: #{tpu_custom_call.1} parent=1 // pred_fallthru
      _
    // Predicated region
    $region6: #{tpu_custom_call.1} parent=1 // pred_check
      _
    $region7: #{tpu_custom_call.1} parent=1 // pred_check_branch
      %30 = sbr.rel (0) target = $region9
    $region8: #{tpu_custom_call.1} parent=1 // pred_region
      %s32 = ssub.s32 128, 128
      %33 = vsyncadd [#allocation6], %s32
      %s34 = sshll.u32 [#allocation5], 4
      %s35 = int_to_ptr.vmem [resolvable:$true] %s34
      %40 = dma.hbm_to_vmem [thread:$0]  %s1, 128, %s35, [#allocation6], 64, 64, 4
    $region9: #{tpu_custom_call.1} parent=1 // pred_fallthru
      _
    // Predicated region
    $region10: #{tpu_custom_call.1} parent=1 // pred_check
      _
    $region11: #{tpu_custom_call.1} parent=1 // pred_check_branch
      %42 = sbr.rel (0) target = $region13
    $region12: #{tpu_custom_call.1} parent=1 // pred_region
      %s44 = ssub.s32 1024, 1024
      %45 = vsyncadd [#allocation6], %s44
      %s46 = sshll.u32 [#allocation7], 4
      %s47 = int_to_ptr.vmem [resolvable:$true] %s46
      %52 = dma.hbm_to_vmem [thread:$0]  %s2, 1024, %s47, [#allocation6], 64, 64, 4
    $region13: #{tpu_custom_call.1} parent=1 // pred_fallthru
      _
    // Predicated region
    $region14: #{tpu_custom_call.1} parent=1 // pred_check
      _
    $region15: #{tpu_custom_call.1} parent=1 // pred_check_branch
      %54 = sbr.rel (0) target = $region17
    $region16: #{tpu_custom_call.1} parent=1 // pred_region
      _
    $region17: #{tpu_custom_call.1} parent=1 // pred_fallthru
      _
    // Predicated region
    $region18: #{tpu_custom_call.1} parent=1 // pred_check
      _
    $region19: #{tpu_custom_call.1} parent=1 // pred_check_branch
      %56 = sbr.rel (0) target = $region21
    $region20: #{tpu_custom_call.1} parent=1 // pred_region
      %s58 = ssub.s32 1024, 1024
      %59 = vsyncadd [#allocation9], %s58
      %s60 = sshll.u32 [#allocation8], 4
      %s61 = int_to_ptr.vmem [resolvable:$true] %s60
      %66 = dma.hbm_to_vmem [thread:$0]  %s4, 1024, %s61, [#allocation9], 64, 64, 4
    $region21: #{tpu_custom_call.1} parent=1 // pred_fallthru
      _
    // Predicated region
    $region22: #{tpu_custom_call.1} parent=1 // pred_check
      _
    $region23: #{tpu_custom_call.1} parent=1 // pred_check_branch
      %68 = sbr.rel (0) target = $region25
    $region24: #{tpu_custom_call.1} parent=1 // pred_region
      _
    $region25: #{tpu_custom_call.1} parent=1 // pred_fallthru
      _
    // Predicated region
    $region26: #{tpu_custom_call.1} parent=1 // pred_check
      _
    $region27: #{tpu_custom_call.1} parent=1 // pred_check_branch
      %70 = sbr.rel (0) target = $region29
    $region28: #{tpu_custom_call.1} parent=1 // pred_region
      %s72 = ssub.s32 1024, 1024
      %73 = vsyncadd [#allocation9], %s72
      %s74 = sshll.u32 [#allocation10], 4
      %s75 = int_to_ptr.vmem [resolvable:$true] %s74
      %80 = dma.hbm_to_vmem [thread:$0]  %s6, 1024, %s75, [#allocation9], 64, 64, 4
    $region29: #{tpu_custom_call.1} parent=1 // pred_fallthru
      _
    // Predicated region
    $region30: #{tpu_custom_call.1} parent=1 // pred_check
      _
    $region31: #{tpu_custom_call.1} parent=1 // pred_check_branch
      %82 = sbr.rel (0) target = $region33
    $region32: #{tpu_custom_call.1} parent=1 // pred_region
      _
    $region33: #{tpu_custom_call.1} parent=1 // pred_fallthru
      _
    // Predicated region
    $region34: #{tpu_custom_call.1} parent=1 // pred_check
      _
    $region35: #{tpu_custom_call.1} parent=1 // pred_check_branch
      %84 = sbr.rel (0) target = $region37
    $region36: #{tpu_custom_call.1} parent=1 // pred_region
      %85 = dma.done [#allocation3], 128
    $region37: #{tpu_custom_call.1} parent=1 // pred_fallthru
      _
    // Predicated region
    $region38: #{tpu_custom_call.1} parent=1 // pred_check
      _
    $region39: #{tpu_custom_call.1} parent=1 // pred_check_branch
      %87 = sbr.rel (0) target = $region41
    $region40: #{tpu_custom_call.1} parent=1 // pred_region
      %88 = dma.done [#allocation6], 128
    $region41: #{tpu_custom_call.1} parent=1 // pred_fallthru
      _
    // Predicated region
    $region42: #{tpu_custom_call.1} parent=1 // pred_check
      _
    $region43: #{tpu_custom_call.1} parent=1 // pred_check_branch
      %90 = sbr.rel (0) target = $region45
    $region44: #{tpu_custom_call.1} parent=1 // pred_region
      %91 = dma.done [#allocation6], 1024
    $region45: #{tpu_custom_call.1} parent=1 // pred_fallthru
      _
    // Predicated region
    $region46: #{tpu_custom_call.1} parent=1 // pred_check
      _
    $region47: #{tpu_custom_call.1} parent=1 // pred_check_branch
      %93 = sbr.rel (0) target = $region49
    $region48: #{tpu_custom_call.1} parent=1 // pred_region
      %94 = dma.done [#allocation9], 1024
    $region49: #{tpu_custom_call.1} parent=1 // pred_fallthru
      _
    // Predicated region
    $region50: #{tpu_custom_call.1} parent=1 // pred_check
      _
    $region51: #{tpu_custom_call.1} parent=1 // pred_check_branch
      %96 = sbr.rel (0) target = $region53
    $region52: #{tpu_custom_call.1} parent=1 // pred_region
      %97 = dma.done [#allocation9], 1024
    $region53: #{tpu_custom_call.1} parent=1 // pred_fallthru
      _
    %v99 = vld [vmem:[#allocation2] sm:$0xf]
    %v100 = vld [vmem:[#allocation2 + $0x4] sm:$0xf]
    %v101 = vld [vmem:[#allocation5] sm:$0xf]
    %v102 = vld [vmem:[#allocation5 + $0x4] sm:$0xf]
    %v103 = vld [vmem:[#allocation7] sm:$0xf]
    %v104 = vld [vmem:[#allocation7 + $0x4] sm:$0xf]
    %v105 = vld [vmem:[#allocation7 + $0x8] sm:$0xf]
    %v106 = vld [vmem:[#allocation7 + $0xc] sm:$0xf]
    %v107 = vld [vmem:[#allocation7 + $0x10] sm:$0xf]
    %v108 = vld [vmem:[#allocation7 + $0x14] sm:$0xf]
    %v109 = vld [vmem:[#allocation7 + $0x18] sm:$0xf]
    %v110 = vld [vmem:[#allocation7 + $0x1c] sm:$0xf]
    %v111 = vld [vmem:[#allocation7 + $0x20] sm:$0xf]
    %v112 = vld [vmem:[#allocation7 + $0x24] sm:$0xf]
    %v113 = vld [vmem:[#allocation7 + $0x28] sm:$0xf]
    %v114 = vld [vmem:[#allocation7 + $0x2c] sm:$0xf]
    %v115 = vld [vmem:[#allocation7 + $0x30] sm:$0xf]
    %v116 = vld [vmem:[#allocation7 + $0x34] sm:$0xf]
    %v117 = vld [vmem:[#allocation7 + $0x38] sm:$0xf]
    %v118 = vld [vmem:[#allocation7 + $0x3c] sm:$0xf]
    %v119 = vld [vmem:[%s3] sm:$0x1]
    %v122 = vunpack.c.l.b16 %v101
    %v123 = vunpack.c.l.b16 %v102
    %v124 = vpack.c.b16 %v123, %v122
    %v142 = vunpack.c.l.b16 %v103
    %v143 = vunpack.c.l.b16 %v104
    %v144 = vunpack.c.l.b16 %v105
    %v145 = vunpack.c.l.b16 %v106
    %v146 = vunpack.c.l.b16 %v107
    %v147 = vunpack.c.l.b16 %v108
    %v148 = vunpack.c.l.b16 %v109
    %v149 = vunpack.c.l.b16 %v110
    %v150 = vunpack.c.l.b16 %v111
    %v151 = vunpack.c.l.b16 %v112
    %v152 = vunpack.c.l.b16 %v113
    %v153 = vunpack.c.l.b16 %v114
    %v154 = vunpack.c.l.b16 %v115
    %v155 = vunpack.c.l.b16 %v116
    %v156 = vunpack.c.l.b16 %v117
    %v157 = vunpack.c.l.b16 %v118
    %v158 = vpack.c.b16 %v143, %v142
    %v159 = vpack.c.b16 %v145, %v144
    %v160 = vpack.c.b16 %v147, %v146
    %v161 = vpack.c.b16 %v149, %v148
    %v162 = vpack.c.b16 %v151, %v150
    %v163 = vpack.c.b16 %v153, %v152
    %v164 = vpack.c.b16 %v155, %v154
    %v165 = vpack.c.b16 %v157, %v156
    %174 = vmatprep.subr.bf16.mxu0 0
    %175 = vmatpush1.bf16.msra.mxu0 %v158
    %176 = vmatprep.subr.bf16.mxu0 0
    %177 = vmatpush1.bf16.msra.mxu0 %v159
    %178 = vmatprep.subr.bf16.mxu0 0
    %179 = vmatpush1.bf16.msra.mxu0 %v160
    %180 = vmatprep.subr.bf16.mxu0 0
    %181 = vmatpush1.bf16.msra.mxu0 %v161
    %182 = vmatprep.subr.bf16.mxu0 0
    %183 = vmatpush1.bf16.msra.mxu0 %v162
    %184 = vmatprep.subr.bf16.mxu0 0
    %185 = vmatpush1.bf16.msra.mxu0 %v163
    %186 = vmatprep.subr.bf16.mxu0 0
    %187 = vmatpush1.bf16.msra.mxu0 %v164
    %188 = vmatprep.subr.bf16.mxu0 0
    %189 = vmatpush1.bf16.msra.mxu0 %v165
    %190 = vmatprep.subr.bf16.mxu0 0
    %191 = vmatpush1.bf16.msra.mxu0 0
    %192 = vmatprep.subr.bf16.mxu0 0
    %193 = vmatpush1.bf16.msra.mxu0 0
    %194 = vmatprep.subr.bf16.mxu0 0
    %195 = vmatpush1.bf16.msra.mxu0 0
    %196 = vmatprep.subr.bf16.mxu0 0
    %197 = vmatpush1.bf16.msra.mxu0 0
    %198 = vmatprep.subr.bf16.mxu0 0
    %199 = vmatpush1.bf16.msra.mxu0 0
    %200 = vmatprep.subr.bf16.mxu0 0
    %201 = vmatpush1.bf16.msra.mxu0 0
    %202 = vmatprep.subr.bf16.mxu0 0
    %203 = vmatpush1.bf16.msra.mxu0 0
    %204 = vmatprep.subr.bf16.mxu0 0
    %205 = vmatpush1.bf16.msra.mxu0 0
    %206 = vmatprep.mubr.bf16.mxu0 0
    %207 = vmatmul.mubr.bf16.gmra.mrb[0].mxu0 %v124
    %v208 = vpop.f32.mrb[0].mxu0
    %v209 = vadd.f32 0.0, %v208
    %v210 = vpop.f32.mrb[0].mxu0
    %v211 = vpop.f32.mrb[0].mxu0
    %v212 = vadd.f32 0.0, %v211
    %v213 = vpop.f32.mrb[0].mxu0
    %214 = vdwg.mxu0
    %v215 = vpack.c.bf16 %v212, %v209
    %v217 = vlaneseq
    %v218 = vshrl.u32 %v217, 7
    %v219 = vsub.s32 0, %v218
    %v220 = vrot.slane %v119, %v219
    %v224 = vunpack.c.l.b16 %v99
    %v225 = vunpack.c.l.b16 %v100
    %v226 = vpack.c.b16 %v225, %v224
    %vm227 = vcmask 130048
    %v229 = vsel %vm227, %v226, 0
    %231 = vmatprep.subr.bf16.mxu0 0
    %232 = vmatpush1.bf16.msra.mxu0 %v215
    %233 = vmatprep.subr.bf16.mxu0 0
    %234 = vmatpush1.bf16.msra.mxu0 0
    %235 = vmatprep.subr.bf16.mxu0 0
    %236 = vmatpush1.bf16.msra.mxu0 0
    %237 = vmatprep.subr.bf16.mxu0 0
    %238 = vmatpush1.bf16.msra.mxu0 0
    %239 = vmatprep.subr.bf16.mxu0 0
    %240 = vmatpush1.bf16.msra.mxu0 0
    %241 = vmatprep.subr.bf16.mxu0 0
    %242 = vmatpush1.bf16.msra.mxu0 0
    %243 = vmatprep.subr.bf16.mxu0 0
    %244 = vmatpush1.bf16.msra.mxu0 0
    %245 = vmatprep.subr.bf16.mxu0 0
    %246 = vmatpush1.bf16.msra.mxu0 0
    %247 = vmatprep.subr.bf16.mxu0 0
    %248 = vmatpush1.bf16.msra.mxu0 0
    %249 = vmatprep.subr.bf16.mxu0 0
    %250 = vmatpush1.bf16.msra.mxu0 0
    %251 = vmatprep.subr.bf16.mxu0 0
    %252 = vmatpush1.bf16.msra.mxu0 0
    %253 = vmatprep.subr.bf16.mxu0 0
    %254 = vmatpush1.bf16.msra.mxu0 0
    %255 = vmatprep.subr.bf16.mxu0 0
    %256 = vmatpush1.bf16.msra.mxu0 0
    %257 = vmatprep.subr.bf16.mxu0 0
    %258 = vmatpush1.bf16.msra.mxu0 0
    %259 = vmatprep.subr.bf16.mxu0 0
    %260 = vmatpush1.bf16.msra.mxu0 0
    %261 = vmatprep.subr.bf16.mxu0 0
    %262 = vmatpush1.bf16.msra.mxu0 0
    %263 = vmatprep.mubr.bf16.mxu0 0
    %264 = vmatmul.mubr.bf16.gmra.mrb[0].mxu0 %v229
    %v265 = vpop.f32.mrb[0].mxu0
    %v266 = vadd.f32 %v220, %v265
    %v267 = vpop.f32.mrb[0].mxu0
    %v268 = vpop.f32.mrb[0].mxu0
    %v269 = vadd.f32 %v220, %v268
    %v270 = vpop.f32.mrb[0].mxu0
    %271 = vdwg.mxu0
    %v272 = vmax.f32 %v266, 0.0
    %v273 = vmax.f32 %v269, 0.0
    %v274 = vld [vmem:[#allocation8] sm:$0xf]
    %v275 = vld [vmem:[#allocation8 + $0x4] sm:$0xf]
    %v276 = vld [vmem:[#allocation8 + $0x8] sm:$0xf]
    %v277 = vld [vmem:[#allocation8 + $0xc] sm:$0xf]
    %v278 = vld [vmem:[#allocation8 + $0x10] sm:$0xf]
    %v279 = vld [vmem:[#allocation8 + $0x14] sm:$0xf]
    %v280 = vld [vmem:[#allocation8 + $0x18] sm:$0xf]
    %v281 = vld [vmem:[#allocation8 + $0x1c] sm:$0xf]
    %v282 = vld [vmem:[#allocation8 + $0x20] sm:$0xf]
    %v283 = vld [vmem:[#allocation8 + $0x24] sm:$0xf]
    %v284 = vld [vmem:[#allocation8 + $0x28] sm:$0xf]
    %v285 = vld [vmem:[#allocation8 + $0x2c] sm:$0xf]
    %v286 = vld [vmem:[#allocation8 + $0x30] sm:$0xf]
    %v287 = vld [vmem:[#allocation8 + $0x34] sm:$0xf]
    %v288 = vld [vmem:[#allocation8 + $0x38] sm:$0xf]
    %v289 = vld [vmem:[#allocation8 + $0x3c] sm:$0xf]
    %v290 = vld [vmem:[%s5] sm:$0x1]
    %v291 = vpack.c.bf16 %v273, %v272
    %v308 = vunpack.c.l.b16 %v274
    %v309 = vunpack.c.l.b16 %v275
    %v310 = vunpack.c.l.b16 %v276
    %v311 = vunpack.c.l.b16 %v277
    %v312 = vunpack.c.l.b16 %v278
    %v313 = vunpack.c.l.b16 %v279
    %v314 = vunpack.c.l.b16 %v280
    %v315 = vunpack.c.l.b16 %v281
    %v316 = vunpack.c.l.b16 %v282
    %v317 = vunpack.c.l.b16 %v283
    %v318 = vunpack.c.l.b16 %v284
    %v319 = vunpack.c.l.b16 %v285
    %v320 = vunpack.c.l.b16 %v286
    %v321 = vunpack.c.l.b16 %v287
    %v322 = vunpack.c.l.b16 %v288
    %v323 = vunpack.c.l.b16 %v289
    %v324 = vpack.c.b16 %v309, %v308
    %v325 = vpack.c.b16 %v311, %v310
    %v326 = vpack.c.b16 %v313, %v312
    %v327 = vpack.c.b16 %v315, %v314
    %v328 = vpack.c.b16 %v317, %v316
    %v329 = vpack.c.b16 %v319, %v318
    %v330 = vpack.c.b16 %v321, %v320
    %v331 = vpack.c.b16 %v323, %v322
    %340 = vmatprep.subr.bf16.mxu0 0
    %341 = vmatpush1.bf16.msra.mxu0 %v324
    %342 = vmatprep.subr.bf16.mxu0 0
    %343 = vmatpush1.bf16.msra.mxu0 %v325
    %344 = vmatprep.subr.bf16.mxu0 0
    %345 = vmatpush1.bf16.msra.mxu0 %v326
    %346 = vmatprep.subr.bf16.mxu0 0
    %347 = vmatpush1.bf16.msra.mxu0 %v327
    %348 = vmatprep.subr.bf16.mxu0 0
    %349 = vmatpush1.bf16.msra.mxu0 %v328
    %350 = vmatprep.subr.bf16.mxu0 0
    %351 = vmatpush1.bf16.msra.mxu0 %v329
    %352 = vmatprep.subr.bf16.mxu0 0
    %353 = vmatpush1.bf16.msra.mxu0 %v330
    %354 = vmatprep.subr.bf16.mxu0 0
    %355 = vmatpush1.bf16.msra.mxu0 %v331
    %356 = vmatprep.subr.bf16.mxu0 0
    %357 = vmatpush1.bf16.msra.mxu0 0
    %358 = vmatprep.subr.bf16.mxu0 0
    %359 = vmatpush1.bf16.msra.mxu0 0
    %360 = vmatprep.subr.bf16.mxu0 0
    %361 = vmatpush1.bf16.msra.mxu0 0
    %362 = vmatprep.subr.bf16.mxu0 0
    %363 = vmatpush1.bf16.msra.mxu0 0
    %364 = vmatprep.subr.bf16.mxu0 0
    %365 = vmatpush1.bf16.msra.mxu0 0
    %366 = vmatprep.subr.bf16.mxu0 0
    %367 = vmatpush1.bf16.msra.mxu0 0
    %368 = vmatprep.subr.bf16.mxu0 0
    %369 = vmatpush1.bf16.msra.mxu0 0
    %370 = vmatprep.subr.bf16.mxu0 0
    %371 = vmatpush1.bf16.msra.mxu0 0
    %372 = vmatprep.mubr.bf16.mxu0 0
    %373 = vmatmul.mubr.bf16.gmra.mrb[0].mxu0 %v291
    %v374 = vpop.f32.mrb[0].mxu0
    %v375 = vadd.f32 0.0, %v374
    %v376 = vpop.f32.mrb[0].mxu0
    %v377 = vpop.f32.mrb[0].mxu0
    %v378 = vadd.f32 0.0, %v377
    %v379 = vpop.f32.mrb[0].mxu0
    %380 = vdwg.mxu0
    %v381 = vpack.c.bf16 %v378, %v375
    %v383 = vlaneseq
    %v384 = vshrl.u32 %v383, 7
    %v385 = vsub.s32 0, %v384
    %v386 = vrot.slane %v290, %v385
    %388 = vmatprep.subr.bf16.mxu0 0
    %389 = vmatpush1.bf16.msra.mxu0 %v381
    %390 = vmatprep.subr.bf16.mxu0 0
    %391 = vmatpush1.bf16.msra.mxu0 0
    %392 = vmatprep.subr.bf16.mxu0 0
    %393 = vmatpush1.bf16.msra.mxu0 0
    %394 = vmatprep.subr.bf16.mxu0 0
    %395 = vmatpush1.bf16.msra.mxu0 0
    %396 = vmatprep.subr.bf16.mxu0 0
    %397 = vmatpush1.bf16.msra.mxu0 0
    %398 = vmatprep.subr.bf16.mxu0 0
    %399 = vmatpush1.bf16.msra.mxu0 0
    %400 = vmatprep.subr.bf16.mxu0 0
    %401 = vmatpush1.bf16.msra.mxu0 0
    %402 = vmatprep.subr.bf16.mxu0 0
    %403 = vmatpush1.bf16.msra.mxu0 0
    %404 = vmatprep.subr.bf16.mxu0 0
    %405 = vmatpush1.bf16.msra.mxu0 0
    %406 = vmatprep.subr.bf16.mxu0 0
    %407 = vmatpush1.bf16.msra.mxu0 0
    %408 = vmatprep.subr.bf16.mxu0 0
    %409 = vmatpush1.bf16.msra.mxu0 0
    %410 = vmatprep.subr.bf16.mxu0 0
    %411 = vmatpush1.bf16.msra.mxu0 0
    %412 = vmatprep.subr.bf16.mxu0 0
    %413 = vmatpush1.bf16.msra.mxu0 0
    %414 = vmatprep.subr.bf16.mxu0 0
    %415 = vmatpush1.bf16.msra.mxu0 0
    %416 = vmatprep.subr.bf16.mxu0 0
    %417 = vmatpush1.bf16.msra.mxu0 0
    %418 = vmatprep.subr.bf16.mxu0 0
    %419 = vmatpush1.bf16.msra.mxu0 0
    %420 = vmatprep.mubr.bf16.mxu0 0
    %421 = vmatmul.mubr.bf16.gmra.mrb[0].mxu0 %v229
    %v422 = vpop.f32.mrb[0].mxu0
    %v423 = vadd.f32 %v386, %v422
    %v424 = vpop.f32.mrb[0].mxu0
    %v425 = vpop.f32.mrb[0].mxu0
    %v426 = vadd.f32 %v386, %v425
    %v427 = vpop.f32.mrb[0].mxu0
    %428 = vdwg.mxu0
    %v429 = vmax.f32 %v423, 0.0
    %v430 = vmax.f32 %v426, 0.0
    %v431 = vld [vmem:[#allocation10] sm:$0xf]
    %v432 = vld [vmem:[#allocation10 + $0x4] sm:$0xf]
    %v433 = vld [vmem:[#allocation10 + $0x8] sm:$0xf]
    %v434 = vld [vmem:[#allocation10 + $0xc] sm:$0xf]
    %v435 = vld [vmem:[#allocation10 + $0x10] sm:$0xf]
    %v436 = vld [vmem:[#allocation10 + $0x14] sm:$0xf]
    %v437 = vld [vmem:[#allocation10 + $0x18] sm:$0xf]
    %v438 = vld [vmem:[#allocation10 + $0x1c] sm:$0xf]
    %v439 = vld [vmem:[#allocation10 + $0x20] sm:$0xf]
    %v440 = vld [vmem:[#allocation10 + $0x24] sm:$0xf]
    %v441 = vld [vmem:[#allocation10 + $0x28] sm:$0xf]
    %v442 = vld [vmem:[#allocation10 + $0x2c] sm:$0xf]
    %v443 = vld [vmem:[#allocation10 + $0x30] sm:$0xf]
    %v444 = vld [vmem:[#allocation10 + $0x34] sm:$0xf]
    %v445 = vld [vmem:[#allocation10 + $0x38] sm:$0xf]
    %v446 = vld [vmem:[#allocation10 + $0x3c] sm:$0xf]
    %v447 = vld [vmem:[%s7] sm:$0x1]
    %v448 = vpack.c.bf16 %v430, %v429
    %v465 = vunpack.c.l.b16 %v431
    %v466 = vunpack.c.l.b16 %v432
    %v467 = vunpack.c.l.b16 %v433
    %v468 = vunpack.c.l.b16 %v434
    %v469 = vunpack.c.l.b16 %v435
    %v470 = vunpack.c.l.b16 %v436
    %v471 = vunpack.c.l.b16 %v437
    %v472 = vunpack.c.l.b16 %v438
    %v473 = vunpack.c.l.b16 %v439
    %v474 = vunpack.c.l.b16 %v440
    %v475 = vunpack.c.l.b16 %v441
    %v476 = vunpack.c.l.b16 %v442
    %v477 = vunpack.c.l.b16 %v443
    %v478 = vunpack.c.l.b16 %v444
    %v479 = vunpack.c.l.b16 %v445
    %v480 = vunpack.c.l.b16 %v446
    %v481 = vpack.c.b16 %v466, %v465
    %v482 = vpack.c.b16 %v468, %v467
    %v483 = vpack.c.b16 %v470, %v469
    %v484 = vpack.c.b16 %v472, %v471
    %v485 = vpack.c.b16 %v474, %v473
    %v486 = vpack.c.b16 %v476, %v475
    %v487 = vpack.c.b16 %v478, %v477
    %v488 = vpack.c.b16 %v480, %v479
    %497 = vmatprep.subr.bf16.mxu0 0
    %498 = vmatpush1.bf16.msra.mxu0 %v481
    %499 = vmatprep.subr.bf16.mxu0 0
    %500 = vmatpush1.bf16.msra.mxu0 %v482
    %501 = vmatprep.subr.bf16.mxu0 0
    %502 = vmatpush1.bf16.msra.mxu0 %v483
    %503 = vmatprep.subr.bf16.mxu0 0
    %504 = vmatpush1.bf16.msra.mxu0 %v484
    %505 = vmatprep.subr.bf16.mxu0 0
    %506 = vmatpush1.bf16.msra.mxu0 %v485
    %507 = vmatprep.subr.bf16.mxu0 0
    %508 = vmatpush1.bf16.msra.mxu0 %v486
    %509 = vmatprep.subr.bf16.mxu0 0
    %510 = vmatpush1.bf16.msra.mxu0 %v487
    %511 = vmatprep.subr.bf16.mxu0 0
    %512 = vmatpush1.bf16.msra.mxu0 %v488
    %513 = vmatprep.subr.bf16.mxu0 0
    %514 = vmatpush1.bf16.msra.mxu0 0
    %515 = vmatprep.subr.bf16.mxu0 0
    %516 = vmatpush1.bf16.msra.mxu0 0
    %517 = vmatprep.subr.bf16.mxu0 0
    %518 = vmatpush1.bf16.msra.mxu0 0
    %519 = vmatprep.subr.bf16.mxu0 0
    %520 = vmatpush1.bf16.msra.mxu0 0
    %521 = vmatprep.subr.bf16.mxu0 0
    %522 = vmatpush1.bf16.msra.mxu0 0
    %523 = vmatprep.subr.bf16.mxu0 0
    %524 = vmatpush1.bf16.msra.mxu0 0
    %525 = vmatprep.subr.bf16.mxu0 0
    %526 = vmatpush1.bf16.msra.mxu0 0
    %527 = vmatprep.subr.bf16.mxu0 0
    %528 = vmatpush1.bf16.msra.mxu0 0
    %529 = vmatprep.mubr.bf16.mxu0 0
    %530 = vmatmul.mubr.bf16.gmra.mrb[0].mxu0 %v448
    %v531 = vpop.f32.mrb[0].mxu0
    %v532 = vadd.f32 0.0, %v531
    %v533 = vpop.f32.mrb[0].mxu0
    %v534 = vpop.f32.mrb[0].mxu0
    %v535 = vadd.f32 0.0, %v534
    %v536 = vpop.f32.mrb[0].mxu0
    %537 = vdwg.mxu0
    %v538 = vpack.c.bf16 %v535, %v532
    %v540 = vlaneseq
    %v541 = vshrl.u32 %v540, 7
    %v542 = vsub.s32 0, %v541
    %v543 = vrot.slane %v447, %v542
    %545 = vmatprep.subr.bf16.mxu0 0
    %546 = vmatpush1.bf16.msra.mxu0 %v538
    %547 = vmatprep.subr.bf16.mxu0 0
    %548 = vmatpush1.bf16.msra.mxu0 0
    %549 = vmatprep.subr.bf16.mxu0 0
    %550 = vmatpush1.bf16.msra.mxu0 0
    %551 = vmatprep.subr.bf16.mxu0 0
    %552 = vmatpush1.bf16.msra.mxu0 0
    %553 = vmatprep.subr.bf16.mxu0 0
    %554 = vmatpush1.bf16.msra.mxu0 0
    %555 = vmatprep.subr.bf16.mxu0 0
    %556 = vmatpush1.bf16.msra.mxu0 0
    %557 = vmatprep.subr.bf16.mxu0 0
    %558 = vmatpush1.bf16.msra.mxu0 0
    %559 = vmatprep.subr.bf16.mxu0 0
    %560 = vmatpush1.bf16.msra.mxu0 0
    %561 = vmatprep.subr.bf16.mxu0 0
    %562 = vmatpush1.bf16.msra.mxu0 0
    %563 = vmatprep.subr.bf16.mxu0 0
    %564 = vmatpush1.bf16.msra.mxu0 0
    %565 = vmatprep.subr.bf16.mxu0 0
    %566 = vmatpush1.bf16.msra.mxu0 0
    %567 = vmatprep.subr.bf16.mxu0 0
    %568 = vmatpush1.bf16.msra.mxu0 0
    %569 = vmatprep.subr.bf16.mxu0 0
    %570 = vmatpush1.bf16.msra.mxu0 0
    %571 = vmatprep.subr.bf16.mxu0 0
    %572 = vmatpush1.bf16.msra.mxu0 0
    %573 = vmatprep.subr.bf16.mxu0 0
    %574 = vmatpush1.bf16.msra.mxu0 0
    %575 = vmatprep.subr.bf16.mxu0 0
    %576 = vmatpush1.bf16.msra.mxu0 0
    %577 = vmatprep.mubr.bf16.mxu0 0
    %578 = vmatmul.mubr.bf16.gmra.mrb[0].mxu0 %v229
    %v579 = vpop.f32.mrb[0].mxu0
    %v580 = vadd.f32 %v543, %v579
    %v581 = vpop.f32.mrb[0].mxu0
    %v582 = vpop.f32.mrb[0].mxu0
    %v583 = vadd.f32 %v543, %v582
    %v584 = vpop.f32.mrb[0].mxu0
    %585 = vdwg.mxu0
    %586 = vst [vmem:[#allocation11] sm:$0xff] %v580
    %587 = vst [vmem:[#allocation11 + $0x8] sm:$0xff] %v583
    // Predicated region
    $region54: #{tpu_custom_call.1} parent=1 // pred_check
      _
    $region55: #{tpu_custom_call.1} parent=1 // pred_check_branch
      %589 = sbr.rel (0) target = $region57
    $region56: #{tpu_custom_call.1} parent=1 // pred_region
      %s591 = ssub.s32 256, 256
      %592 = vsyncadd [#allocation4], %s591
      %s593 = sshll.u32 [#allocation11], 4
      %s594 = int_to_ptr.vmem [resolvable:$true] %s593
      %599 = dma.vmem_to_hbm [thread:$0]  %s594, 256, %s8, [#allocation4], 128, 128, 8
    $region57: #{tpu_custom_call.1} parent=1 // pred_fallthru
      _
    // Predicated region
    $region58: #{tpu_custom_call.1} parent=1 // pred_check
      _
    $region59: #{tpu_custom_call.1} parent=1 // pred_check_branch
      %601 = sbr.rel (0) target = $region61
    $region60: #{tpu_custom_call.1} parent=1 // pred_region
      %602 = dma.done [#allocation4], 256
    $region61: #{tpu_custom_call.1} parent=1 // pred_fallthru
      _
    %603 = vsyncpa [#allocation3], 1
    %604 = vsyncpa [#allocation6], 1
    %605 = vsyncpa [#allocation9], 1
    %606 = vsyncpa [#allocation4], 1

</llo_original>
